<compile_context>
chip_gen: v7x
topology: tpu7x:2x2x1
jax: 0.10.0
libtpu: 0.0.40
codegen_flags: <defaults>
</compile_context>

<pallas_src>
import functools

import jax
import jax.numpy as jnp
import numpy as np
from jax.experimental import pallas as pl
from jax.experimental.pallas import tpu as pltpu

_LANE = 128


def _round_up(x, m):
    return ((x + m - 1) // m) * m


def _feature_kernel(p_ref, dist_ref, cosang_ref, cos_ref, sin_ref):
    # p_ref block: (3, 10, TN) — coord plane on dim 0, point index on
    # sublanes, batch on lanes.
    px = p_ref[0, :, :]          # (10, TN)
    py = p_ref[1, :, :]
    pz = p_ref[2, :, :]

    # V12 = P[:, 1:10, :] - P[:, 0:9, :]   -> (9, TN) per coordinate
    vx = px[1:10, :] - px[0:9, :]
    vy = py[1:10, :] - py[0:9, :]
    vz = pz[1:10, :] - pz[0:9, :]

    # a = V12[0:8], b = V12[1:9]
    ax, ay, az = vx[0:8, :], vy[0:8, :], vz[0:8, :]
    bx, by, bz = vx[1:9, :], vy[1:9, :], vz[1:9, :]

    # C = cross(a, b)                      -> (8, TN) per coordinate
    cx = ay * bz - az * by
    cy = az * bx - ax * bz
    cz = ax * by - ay * bx

    # N = cross(C[1:8], V12[1:8])          -> (7, TN) per coordinate
    c1x, c1y, c1z = cx[1:8, :], cy[1:8, :], cz[1:8, :]
    wx, wy, wz = vx[1:8, :], vy[1:8, :], vz[1:8, :]
    nx = c1y * wz - c1z * wy
    ny = c1z * wx - c1x * wz
    nz = c1x * wy - c1y * wx

    c0x, c0y, c0z = cx[0:7, :], cy[0:7, :], cz[0:7, :]

    # rsqrt (EUP slot) + multiplies instead of sqrt + chained divides (VALU).
    inv_c0 = jax.lax.rsqrt(c0x * c0x + c0y * c0y + c0z * c0z)
    inv_c1 = jax.lax.rsqrt(c1x * c1x + c1y * c1y + c1z * c1z)
    inv_n = jax.lax.rsqrt(nx * nx + ny * ny + nz * nz)

    cos_ref[...] = (c0x * c1x + c0y * c1y + c0z * c1z) * inv_c0 * inv_c1
    sin_ref[...] = (c0x * nx + c0y * ny + c0z * nz) * inv_c0 * inv_n

    # cos of bond angles (acos applied outside the kernel).
    inv_a = jax.lax.rsqrt(ax * ax + ay * ay + az * az)
    inv_b = jax.lax.rsqrt(bx * bx + by * by + bz * bz)
    cosang_ref[...] = (ax * bx + ay * by + az * bz) * inv_a * inv_b

    # Dist = ||V||, V = cat(V12, V13, ..., V110) -> (45, TN).  Each piece is
    # written directly into its static sublane slice of the output (no
    # in-kernel concatenate); the d=1 piece reuses V12.
    off = 0
    for d in range(1, 10):
        m = 10 - d
        if d == 1:
            dx, dy, dz = vx, vy, vz
        else:
            dx = px[d:10, :] - px[0:m, :]
            dy = py[d:10, :] - py[0:m, :]
            dz = pz[d:10, :] - pz[0:m, :]
        dist_ref[off:off + m, :] = jnp.sqrt(dx * dx + dy * dy + dz * dz)
        off += m


@functools.partial(jax.jit, static_argnames=("block_n",))
def feature_old(U, block_n=1024):
    """Pallas implementation of Feature_old.forward; returns (Dist, COS, SIN, Angles)."""
    n = U.shape[0]
    block_n = _round_up(block_n, _LANE)
    tn = min(block_n, _round_up(n, _LANE))
    n_pad = _round_up(n, tn)

    P = U.reshape(n, 10, 3).astype(jnp.float32)
    Pt = jnp.transpose(P, (2, 1, 0))                    # (3, 10, n), batch on lanes
    if n_pad != n:
        Pt = jnp.pad(Pt, ((0, 0), (0, 0), (0, n_pad - n)))

    grid = (n_pad // tn,)
    dist_t, cosang_t, cos_t, sin_t = pl.pallas_call(
        _feature_kernel,
        grid=grid,
        in_specs=[pl.BlockSpec((3, 10, tn), lambda i: (0, 0, i))],
        out_specs=(
            pl.BlockSpec((45, tn), lambda i: (0, i)),
            pl.BlockSpec((8, tn), lambda i: (0, i)),
            pl.BlockSpec((7, tn), lambda i: (0, i)),
            pl.BlockSpec((7, tn), lambda i: (0, i)),
        ),
        out_shape=(
            jax.ShapeDtypeStruct((45, n_pad), jnp.float32),  # Dist
            jax.ShapeDtypeStruct((8, n_pad), jnp.float32),   # cos(Angles)
            jax.ShapeDtypeStruct((7, n_pad), jnp.float32),   # COS
            jax.ShapeDtypeStruct((7, n_pad), jnp.float32),   # SIN
        ),
        compiler_params=pltpu.CompilerParams(
            dimension_semantics=("parallel",),
            vmem_limit_bytes=32 * 1024 * 1024,
        ),
    )(Pt)

    dist = dist_t[:, :n].T
    cosv = cos_t[:, :n].T
    sinv = sin_t[:, :n].T
    # TODO(synk): arccos kept outside the kernel (inverse-trig lowering on
    # Mosaic is not guaranteed); it fuses with the output transpose under jit.
    angles = jnp.arccos(cosang_t[:, :n].T)
    return dist, cosv, sinv, angles


def _feature_old_ref(U):
    """Pure-JAX reference mirroring the torch module."""
    n = U.shape[0]
    P = U.reshape(n, 10, 3).astype(jnp.float32)
    V12 = P[:, 1:10, :] - P[:, 0:9, :]
    Vs = [P[:, d:10, :] - P[:, 0:10 - d, :] for d in range(1, 10)]
    V = jnp.concatenate(Vs, axis=1)
    C = jnp.cross(V12[:, 0:8, :], V12[:, 1:9, :], axis=2)
    N = jnp.cross(C[:, 1:8], V12[:, 1:8, :], axis=2)
    nrm = lambda x: jnp.linalg.norm(x, axis=2)
    COS = jnp.sum(C[:, 0:7, :] * C[:, 1:8, :], axis=2) / nrm(C[:, 0:7, :]) / nrm(C[:, 1:8, :])
    SIN = jnp.sum(C[:, 0:7, :] * N[:, 0:7, :], axis=2) / nrm(C[:, 0:7, :]) / nrm(N[:, 0:7, :])
    Angles = jnp.arccos(jnp.sum(V12[:, 0:8, :] * V12[:, 1:9, :], axis=2)
                        / nrm(V12[:, 0:8, :]) / nrm(V12[:, 1:9, :]))
    Dist = nrm(V)
    return Dist, COS, SIN, Angles


if __name__ == "__main__":
    key = jax.random.PRNGKey(0)

    # Small case (pads 8 -> 128 lanes, single grid step).
    n = 8
    U = jax.random.normal(key, (n, 30), dtype=jnp.float32)
    out = jax.block_until_ready(feature_old(U))
    dist, cosv, sinv, angles = out
    ref = _feature_old_ref(U)
    for got, want in zip((dist, cosv, sinv, angles), ref):
        np.testing.assert_allclose(np.asarray(got), np.asarray(want),
                                   rtol=2e-3, atol=2e-3)
    assert dist.shape == (n, 45) and cosv.shape == (n, 7)
    assert sinv.shape == (n, 7) and angles.shape == (n, 8)

    # Multi-block case (exercises grid tiling + padding path).
    n2 = 300
    U2 = jax.random.normal(jax.random.PRNGKey(1), (n2, 30), dtype=jnp.float32)
    out2 = jax.block_until_ready(feature_old(U2, block_n=128))
    ref2 = _feature_old_ref(U2)
    for got, want in zip(out2, ref2):
        np.testing.assert_allclose(np.asarray(got), np.asarray(want),
                                   rtol=2e-3, atol=2e-3)

    print("KERNEL_OK")
</pallas_src>

<mosaic_0001>
module attributes {stable_mosaic.version = 11 : i64} {
  func.func @_feature_kernel(%arg0: i32, %arg1: memref<3x10x128xf32, #tpu.memory_space<vmem>>, %arg2: memref<45x128xf32, #tpu.memory_space<vmem>>, %arg3: memref<8x128xf32, #tpu.memory_space<vmem>>, %arg4: memref<7x128xf32, #tpu.memory_space<vmem>>, %arg5: memref<7x128xf32, #tpu.memory_space<vmem>>) attributes {dimension_semantics = [#tpu.dimension_semantics<parallel>], iteration_bounds = array<i64: 1>, scalar_prefetch = 0 : i64, scratch_operands = 0 : i64, tpu.core_type = #tpu.core_type<tc>, window_params = [{transform_indices = @transform_0, window_bounds = array<i64: 3, 10, 128>}, {transform_indices = @transform_1, window_bounds = array<i64: 45, 128>}, {transform_indices = @transform_2, window_bounds = array<i64: 8, 128>}, {transform_indices = @transform_3, window_bounds = array<i64: 7, 128>}, {transform_indices = @transform_4, window_bounds = array<i64: 7, 128>}]} {
    %c0 = arith.constant 0 : index
    %c0_0 = arith.constant 0 : index
    %c0_1 = arith.constant 0 : index
    %0 = vector.load %arg1[%c0, %c0_0, %c0_1] : memref<3x10x128xf32, #tpu.memory_space<vmem>>, vector<1x10x128xf32>
    %1 = vector.shape_cast %0 : vector<1x10x128xf32> to vector<10x128xf32>
    %c1 = arith.constant 1 : index
    %c0_2 = arith.constant 0 : index
    %c0_3 = arith.constant 0 : index
    %2 = vector.load %arg1[%c1, %c0_2, %c0_3] : memref<3x10x128xf32, #tpu.memory_space<vmem>>, vector<1x10x128xf32>
    %3 = vector.shape_cast %2 : vector<1x10x128xf32> to vector<10x128xf32>
    %c2 = arith.constant 2 : index
    %c0_4 = arith.constant 0 : index
    %c0_5 = arith.constant 0 : index
    %4 = vector.load %arg1[%c2, %c0_4, %c0_5] : memref<3x10x128xf32, #tpu.memory_space<vmem>>, vector<1x10x128xf32>
    %5 = vector.shape_cast %4 : vector<1x10x128xf32> to vector<10x128xf32>
    %6 = vector.extract_strided_slice %1 {offsets = [1, 0], sizes = [9, 128], strides = [1, 1]} : vector<10x128xf32> to vector<9x128xf32>
    %7 = vector.extract_strided_slice %1 {offsets = [0, 0], sizes = [9, 128], strides = [1, 1]} : vector<10x128xf32> to vector<9x128xf32>
    %8 = arith.subf %6, %7 : vector<9x128xf32>
    %9 = vector.extract_strided_slice %3 {offsets = [1, 0], sizes = [9, 128], strides = [1, 1]} : vector<10x128xf32> to vector<9x128xf32>
    %10 = vector.extract_strided_slice %3 {offsets = [0, 0], sizes = [9, 128], strides = [1, 1]} : vector<10x128xf32> to vector<9x128xf32>
    %11 = arith.subf %9, %10 : vector<9x128xf32>
    %12 = vector.extract_strided_slice %5 {offsets = [1, 0], sizes = [9, 128], strides = [1, 1]} : vector<10x128xf32> to vector<9x128xf32>
    %13 = vector.extract_strided_slice %5 {offsets = [0, 0], sizes = [9, 128], strides = [1, 1]} : vector<10x128xf32> to vector<9x128xf32>
    %14 = arith.subf %12, %13 : vector<9x128xf32>
    %15 = vector.extract_strided_slice %8 {offsets = [0, 0], sizes = [8, 128], strides = [1, 1]} : vector<9x128xf32> to vector<8x128xf32>
    %16 = vector.extract_strided_slice %11 {offsets = [0, 0], sizes = [8, 128], strides = [1, 1]} : vector<9x128xf32> to vector<8x128xf32>
    %17 = vector.extract_strided_slice %14 {offsets = [0, 0], sizes = [8, 128], strides = [1, 1]} : vector<9x128xf32> to vector<8x128xf32>
    %18 = vector.extract_strided_slice %8 {offsets = [1, 0], sizes = [8, 128], strides = [1, 1]} : vector<9x128xf32> to vector<8x128xf32>
    %19 = vector.extract_strided_slice %11 {offsets = [1, 0], sizes = [8, 128], strides = [1, 1]} : vector<9x128xf32> to vector<8x128xf32>
    %20 = vector.extract_strided_slice %14 {offsets = [1, 0], sizes = [8, 128], strides = [1, 1]} : vector<9x128xf32> to vector<8x128xf32>
    %21 = arith.mulf %16, %20 : vector<8x128xf32>
    %22 = arith.mulf %17, %19 : vector<8x128xf32>
    %23 = arith.subf %21, %22 : vector<8x128xf32>
    %24 = arith.mulf %17, %18 : vector<8x128xf32>
    %25 = arith.mulf %15, %20 : vector<8x128xf32>
    %26 = arith.subf %24, %25 : vector<8x128xf32>
    %27 = arith.mulf %15, %19 : vector<8x128xf32>
    %28 = arith.mulf %16, %18 : vector<8x128xf32>
    %29 = arith.subf %27, %28 : vector<8x128xf32>
    %30 = vector.extract_strided_slice %23 {offsets = [1, 0], sizes = [7, 128], strides = [1, 1]} : vector<8x128xf32> to vector<7x128xf32>
    %31 = vector.extract_strided_slice %26 {offsets = [1, 0], sizes = [7, 128], strides = [1, 1]} : vector<8x128xf32> to vector<7x128xf32>
    %32 = vector.extract_strided_slice %29 {offsets = [1, 0], sizes = [7, 128], strides = [1, 1]} : vector<8x128xf32> to vector<7x128xf32>
    %33 = vector.extract_strided_slice %8 {offsets = [1, 0], sizes = [7, 128], strides = [1, 1]} : vector<9x128xf32> to vector<7x128xf32>
    %34 = vector.extract_strided_slice %11 {offsets = [1, 0], sizes = [7, 128], strides = [1, 1]} : vector<9x128xf32> to vector<7x128xf32>
    %35 = vector.extract_strided_slice %14 {offsets = [1, 0], sizes = [7, 128], strides = [1, 1]} : vector<9x128xf32> to vector<7x128xf32>
    %36 = arith.mulf %31, %35 : vector<7x128xf32>
    %37 = arith.mulf %32, %34 : vector<7x128xf32>
    %38 = arith.subf %36, %37 : vector<7x128xf32>
    %39 = arith.mulf %32, %33 : vector<7x128xf32>
    %40 = arith.mulf %30, %35 : vector<7x128xf32>
    %41 = arith.subf %39, %40 : vector<7x128xf32>
    %42 = arith.mulf %30, %34 : vector<7x128xf32>
    %43 = arith.mulf %31, %33 : vector<7x128xf32>
    %44 = arith.subf %42, %43 : vector<7x128xf32>
    %45 = vector.extract_strided_slice %23 {offsets = [0, 0], sizes = [7, 128], strides = [1, 1]} : vector<8x128xf32> to vector<7x128xf32>
    %46 = vector.extract_strided_slice %26 {offsets = [0, 0], sizes = [7, 128], strides = [1, 1]} : vector<8x128xf32> to vector<7x128xf32>
    %47 = vector.extract_strided_slice %29 {offsets = [0, 0], sizes = [7, 128], strides = [1, 1]} : vector<8x128xf32> to vector<7x128xf32>
    %48 = arith.mulf %45, %45 : vector<7x128xf32>
    %49 = arith.mulf %46, %46 : vector<7x128xf32>
    %50 = arith.addf %48, %49 : vector<7x128xf32>
    %51 = arith.mulf %47, %47 : vector<7x128xf32>
    %52 = arith.addf %50, %51 : vector<7x128xf32>
    %53 = math.rsqrt %52 : vector<7x128xf32>
    %54 = arith.mulf %30, %30 : vector<7x128xf32>
    %55 = arith.mulf %31, %31 : vector<7x128xf32>
    %56 = arith.addf %54, %55 : vector<7x128xf32>
    %57 = arith.mulf %32, %32 : vector<7x128xf32>
    %58 = arith.addf %56, %57 : vector<7x128xf32>
    %59 = math.rsqrt %58 : vector<7x128xf32>
    %60 = arith.mulf %38, %38 : vector<7x128xf32>
    %61 = arith.mulf %41, %41 : vector<7x128xf32>
    %62 = arith.addf %60, %61 : vector<7x128xf32>
    %63 = arith.mulf %44, %44 : vector<7x128xf32>
    %64 = arith.addf %62, %63 : vector<7x128xf32>
    %65 = math.rsqrt %64 : vector<7x128xf32>
    %66 = arith.mulf %45, %30 : vector<7x128xf32>
    %67 = arith.mulf %46, %31 : vector<7x128xf32>
    %68 = arith.addf %66, %67 : vector<7x128xf32>
    %69 = arith.mulf %47, %32 : vector<7x128xf32>
    %70 = arith.addf %68, %69 : vector<7x128xf32>
    %71 = arith.mulf %70, %53 : vector<7x128xf32>
    %72 = arith.mulf %71, %59 : vector<7x128xf32>
    %c0_6 = arith.constant 0 : index
    %c0_7 = arith.constant 0 : index
    %73 = vector.load %arg4[%c0_6, %c0_7] : memref<7x128xf32, #tpu.memory_space<vmem>>, vector<7x128xf32>
    tpu.vector_store %arg4[%c0_6, %c0_7], %72 {strides = array<i32>} : memref<7x128xf32, #tpu.memory_space<vmem>>, vector<7x128xf32>,
    %74 = arith.mulf %45, %38 : vector<7x128xf32>
    %75 = arith.mulf %46, %41 : vector<7x128xf32>
    %76 = arith.addf %74, %75 : vector<7x128xf32>
    %77 = arith.mulf %47, %44 : vector<7x128xf32>
    %78 = arith.addf %76, %77 : vector<7x128xf32>
    %79 = arith.mulf %78, %53 : vector<7x128xf32>
    %80 = arith.mulf %79, %65 : vector<7x128xf32>
    %c0_8 = arith.constant 0 : index
    %c0_9 = arith.constant 0 : index
    %81 = vector.load %arg5[%c0_8, %c0_9] : memref<7x128xf32, #tpu.memory_space<vmem>>, vector<7x128xf32>
    tpu.vector_store %arg5[%c0_8, %c0_9], %80 {strides = array<i32>} : memref<7x128xf32, #tpu.memory_space<vmem>>, vector<7x128xf32>,
    %82 = arith.mulf %15, %15 : vector<8x128xf32>
    %83 = arith.mulf %16, %16 : vector<8x128xf32>
    %84 = arith.addf %82, %83 : vector<8x128xf32>
    %85 = arith.mulf %17, %17 : vector<8x128xf32>
    %86 = arith.addf %84, %85 : vector<8x128xf32>
    %87 = math.rsqrt %86 : vector<8x128xf32>
    %88 = arith.mulf %18, %18 : vector<8x128xf32>
    %89 = arith.mulf %19, %19 : vector<8x128xf32>
    %90 = arith.addf %88, %89 : vector<8x128xf32>
    %91 = arith.mulf %20, %20 : vector<8x128xf32>
    %92 = arith.addf %90, %91 : vector<8x128xf32>
    %93 = math.rsqrt %92 : vector<8x128xf32>
    %94 = arith.mulf %15, %18 : vector<8x128xf32>
    %95 = arith.mulf %16, %19 : vector<8x128xf32>
    %96 = arith.addf %94, %95 : vector<8x128xf32>
    %97 = arith.mulf %17, %20 : vector<8x128xf32>
    %98 = arith.addf %96, %97 : vector<8x128xf32>
    %99 = arith.mulf %98, %87 : vector<8x128xf32>
    %100 = arith.mulf %99, %93 : vector<8x128xf32>
    %c0_10 = arith.constant 0 : index
    %c0_11 = arith.constant 0 : index
    %101 = vector.load %arg3[%c0_10, %c0_11] : memref<8x128xf32, #tpu.memory_space<vmem>>, vector<8x128xf32>
    tpu.vector_store %arg3[%c0_10, %c0_11], %100 {strides = array<i32>} : memref<8x128xf32, #tpu.memory_space<vmem>>, vector<8x128xf32>,
    %102 = arith.mulf %8, %8 : vector<9x128xf32>
    %103 = arith.mulf %11, %11 : vector<9x128xf32>
    %104 = arith.addf %102, %103 : vector<9x128xf32>
    %105 = arith.mulf %14, %14 : vector<9x128xf32>
    %106 = arith.addf %104, %105 : vector<9x128xf32>
    %107 = math.sqrt %106 : vector<9x128xf32>
    %c0_12 = arith.constant 0 : index
    %c0_13 = arith.constant 0 : index
    %108 = vector.load %arg2[%c0_12, %c0_13] : memref<45x128xf32, #tpu.memory_space<vmem>>, vector<9x128xf32>
    tpu.vector_store %arg2[%c0_12, %c0_13], %107 {strides = array<i32>} : memref<45x128xf32, #tpu.memory_space<vmem>>, vector<9x128xf32>,
    %109 = vector.extract_strided_slice %1 {offsets = [2, 0], sizes = [8, 128], strides = [1, 1]} : vector<10x128xf32> to vector<8x128xf32>
    %110 = vector.extract_strided_slice %1 {offsets = [0, 0], sizes = [8, 128], strides = [1, 1]} : vector<10x128xf32> to vector<8x128xf32>
    %111 = arith.subf %109, %110 : vector<8x128xf32>
    %112 = vector.extract_strided_slice %3 {offsets = [2, 0], sizes = [8, 128], strides = [1, 1]} : vector<10x128xf32> to vector<8x128xf32>
    %113 = vector.extract_strided_slice %3 {offsets = [0, 0], sizes = [8, 128], strides = [1, 1]} : vector<10x128xf32> to vector<8x128xf32>
    %114 = arith.subf %112, %113 : vector<8x128xf32>
    %115 = vector.extract_strided_slice %5 {offsets = [2, 0], sizes = [8, 128], strides = [1, 1]} : vector<10x128xf32> to vector<8x128xf32>
    %116 = vector.extract_strided_slice %5 {offsets = [0, 0], sizes = [8, 128], strides = [1, 1]} : vector<10x128xf32> to vector<8x128xf32>
    %117 = arith.subf %115, %116 : vector<8x128xf32>
    %118 = arith.mulf %111, %111 : vector<8x128xf32>
    %119 = arith.mulf %114, %114 : vector<8x128xf32>
    %120 = arith.addf %118, %119 : vector<8x128xf32>
    %121 = arith.mulf %117, %117 : vector<8x128xf32>
    %122 = arith.addf %120, %121 : vector<8x128xf32>
    %123 = math.sqrt %122 : vector<8x128xf32>
    %c9 = arith.constant 9 : index
    %c0_14 = arith.constant 0 : index
    %124 = vector.load %arg2[%c9, %c0_14] : memref<45x128xf32, #tpu.memory_space<vmem>>, vector<8x128xf32>
    tpu.vector_store %arg2[%c9, %c0_14], %123 {strides = array<i32>} : memref<45x128xf32, #tpu.memory_space<vmem>>, vector<8x128xf32>,
    %125 = vector.extract_strided_slice %1 {offsets = [3, 0], sizes = [7, 128], strides = [1, 1]} : vector<10x128xf32> to vector<7x128xf32>
    %126 = vector.extract_strided_slice %1 {offsets = [0, 0], sizes = [7, 128], strides = [1, 1]} : vector<10x128xf32> to vector<7x128xf32>
    %127 = arith.subf %125, %126 : vector<7x128xf32>
    %128 = vector.extract_strided_slice %3 {offsets = [3, 0], sizes = [7, 128], strides = [1, 1]} : vector<10x128xf32> to vector<7x128xf32>
    %129 = vector.extract_strided_slice %3 {offsets = [0, 0], sizes = [7, 128], strides = [1, 1]} : vector<10x128xf32> to vector<7x128xf32>
    %130 = arith.subf %128, %129 : vector<7x128xf32>
    %131 = vector.extract_strided_slice %5 {offsets = [3, 0], sizes = [7, 128], strides = [1, 1]} : vector<10x128xf32> to vector<7x128xf32>
    %132 = vector.extract_strided_slice %5 {offsets = [0, 0], sizes = [7, 128], strides = [1, 1]} : vector<10x128xf32> to vector<7x128xf32>
    %133 = arith.subf %131, %132 : vector<7x128xf32>
    %134 = arith.mulf %127, %127 : vector<7x128xf32>
    %135 = arith.mulf %130, %130 : vector<7x128xf32>
    %136 = arith.addf %134, %135 : vector<7x128xf32>
    %137 = arith.mulf %133, %133 : vector<7x128xf32>
    %138 = arith.addf %136, %137 : vector<7x128xf32>
    %139 = math.sqrt %138 : vector<7x128xf32>
    %c17 = arith.constant 17 : index
    %c0_15 = arith.constant 0 : index
    %140 = vector.load %arg2[%c17, %c0_15] : memref<45x128xf32, #tpu.memory_space<vmem>>, vector<7x128xf32>
    tpu.vector_store %arg2[%c17, %c0_15], %139 {strides = array<i32>} : memref<45x128xf32, #tpu.memory_space<vmem>>, vector<7x128xf32>,
    %141 = vector.extract_strided_slice %1 {offsets = [4, 0], sizes = [6, 128], strides = [1, 1]} : vector<10x128xf32> to vector<6x128xf32>
    %142 = vector.extract_strided_slice %1 {offsets = [0, 0], sizes = [6, 128], strides = [1, 1]} : vector<10x128xf32> to vector<6x128xf32>
    %143 = arith.subf %141, %142 : vector<6x128xf32>
    %144 = vector.extract_strided_slice %3 {offsets = [4, 0], sizes = [6, 128], strides = [1, 1]} : vector<10x128xf32> to vector<6x128xf32>
    %145 = vector.extract_strided_slice %3 {offsets = [0, 0], sizes = [6, 128], strides = [1, 1]} : vector<10x128xf32> to vector<6x128xf32>
    %146 = arith.subf %144, %145 : vector<6x128xf32>
    %147 = vector.extract_strided_slice %5 {offsets = [4, 0], sizes = [6, 128], strides = [1, 1]} : vector<10x128xf32> to vector<6x128xf32>
    %148 = vector.extract_strided_slice %5 {offsets = [0, 0], sizes = [6, 128], strides = [1, 1]} : vector<10x128xf32> to vector<6x128xf32>
    %149 = arith.subf %147, %148 : vector<6x128xf32>
    %150 = arith.mulf %143, %143 : vector<6x128xf32>
    %151 = arith.mulf %146, %146 : vector<6x128xf32>
    %152 = arith.addf %150, %151 : vector<6x128xf32>
    %153 = arith.mulf %149, %149 : vector<6x128xf32>
    %154 = arith.addf %152, %153 : vector<6x128xf32>
    %155 = math.sqrt %154 : vector<6x128xf32>
    %c24 = arith.constant 24 : index
    %c0_16 = arith.constant 0 : index
    %156 = vector.load %arg2[%c24, %c0_16] : memref<45x128xf32, #tpu.memory_space<vmem>>, vector<6x128xf32>
    tpu.vector_store %arg2[%c24, %c0_16], %155 {strides = array<i32>} : memref<45x128xf32, #tpu.memory_space<vmem>>, vector<6x128xf32>,
    %157 = vector.extract_strided_slice %1 {offsets = [5, 0], sizes = [5, 128], strides = [1, 1]} : vector<10x128xf32> to vector<5x128xf32>
    %158 = vector.extract_strided_slice %1 {offsets = [0, 0], sizes = [5, 128], strides = [1, 1]} : vector<10x128xf32> to vector<5x128xf32>
    %159 = arith.subf %157, %158 : vector<5x128xf32>
    %160 = vector.extract_strided_slice %3 {offsets = [5, 0], sizes = [5, 128], strides = [1, 1]} : vector<10x128xf32> to vector<5x128xf32>
    %161 = vector.extract_strided_slice %3 {offsets = [0, 0], sizes = [5, 128], strides = [1, 1]} : vector<10x128xf32> to vector<5x128xf32>
    %162 = arith.subf %160, %161 : vector<5x128xf32>
    %163 = vector.extract_strided_slice %5 {offsets = [5, 0], sizes = [5, 128], strides = [1, 1]} : vector<10x128xf32> to vector<5x128xf32>
    %164 = vector.extract_strided_slice %5 {offsets = [0, 0], sizes = [5, 128], strides = [1, 1]} : vector<10x128xf32> to vector<5x128xf32>
    %165 = arith.subf %163, %164 : vector<5x128xf32>
    %166 = arith.mulf %159, %159 : vector<5x128xf32>
    %167 = arith.mulf %162, %162 : vector<5x128xf32>
    %168 = arith.addf %166, %167 : vector<5x128xf32>
    %169 = arith.mulf %165, %165 : vector<5x128xf32>
    %170 = arith.addf %168, %169 : vector<5x128xf32>
    %171 = math.sqrt %170 : vector<5x128xf32>
    %c30 = arith.constant 30 : index
    %c0_17 = arith.constant 0 : index
    %172 = vector.load %arg2[%c30, %c0_17] : memref<45x128xf32, #tpu.memory_space<vmem>>, vector<5x128xf32>
    tpu.vector_store %arg2[%c30, %c0_17], %171 {strides = array<i32>} : memref<45x128xf32, #tpu.memory_space<vmem>>, vector<5x128xf32>,
    %173 = vector.extract_strided_slice %1 {offsets = [6, 0], sizes = [4, 128], strides = [1, 1]} : vector<10x128xf32> to vector<4x128xf32>
    %174 = vector.extract_strided_slice %1 {offsets = [0, 0], sizes = [4, 128], strides = [1, 1]} : vector<10x128xf32> to vector<4x128xf32>
    %175 = arith.subf %173, %174 : vector<4x128xf32>
    %176 = vector.extract_strided_slice %3 {offsets = [6, 0], sizes = [4, 128], strides = [1, 1]} : vector<10x128xf32> to vector<4x128xf32>
    %177 = vector.extract_strided_slice %3 {offsets = [0, 0], sizes = [4, 128], strides = [1, 1]} : vector<10x128xf32> to vector<4x128xf32>
    %178 = arith.subf %176, %177 : vector<4x128xf32>
    %179 = vector.extract_strided_slice %5 {offsets = [6, 0], sizes = [4, 128], strides = [1, 1]} : vector<10x128xf32> to vector<4x128xf32>
    %180 = vector.extract_strided_slice %5 {offsets = [0, 0], sizes = [4, 128], strides = [1, 1]} : vector<10x128xf32> to vector<4x128xf32>
    %181 = arith.subf %179, %180 : vector<4x128xf32>
    %182 = arith.mulf %175, %175 : vector<4x128xf32>
    %183 = arith.mulf %178, %178 : vector<4x128xf32>
    %184 = arith.addf %182, %183 : vector<4x128xf32>
    %185 = arith.mulf %181, %181 : vector<4x128xf32>
    %186 = arith.addf %184, %185 : vector<4x128xf32>
    %187 = math.sqrt %186 : vector<4x128xf32>
    %c35 = arith.constant 35 : index
    %c0_18 = arith.constant 0 : index
    %188 = vector.load %arg2[%c35, %c0_18] : memref<45x128xf32, #tpu.memory_space<vmem>>, vector<4x128xf32>
    tpu.vector_store %arg2[%c35, %c0_18], %187 {strides = array<i32>} : memref<45x128xf32, #tpu.memory_space<vmem>>, vector<4x128xf32>,
    %189 = vector.extract_strided_slice %1 {offsets = [7, 0], sizes = [3, 128], strides = [1, 1]} : vector<10x128xf32> to vector<3x128xf32>
    %190 = vector.extract_strided_slice %1 {offsets = [0, 0], sizes = [3, 128], strides = [1, 1]} : vector<10x128xf32> to vector<3x128xf32>
    %191 = arith.subf %189, %190 : vector<3x128xf32>
    %192 = vector.extract_strided_slice %3 {offsets = [7, 0], sizes = [3, 128], strides = [1, 1]} : vector<10x128xf32> to vector<3x128xf32>
    %193 = vector.extract_strided_slice %3 {offsets = [0, 0], sizes = [3, 128], strides = [1, 1]} : vector<10x128xf32> to vector<3x128xf32>
    %194 = arith.subf %192, %193 : vector<3x128xf32>
    %195 = vector.extract_strided_slice %5 {offsets = [7, 0], sizes = [3, 128], strides = [1, 1]} : vector<10x128xf32> to vector<3x128xf32>
    %196 = vector.extract_strided_slice %5 {offsets = [0, 0], sizes = [3, 128], strides = [1, 1]} : vector<10x128xf32> to vector<3x128xf32>
    %197 = arith.subf %195, %196 : vector<3x128xf32>
    %198 = arith.mulf %191, %191 : vector<3x128xf32>
    %199 = arith.mulf %194, %194 : vector<3x128xf32>
    %200 = arith.addf %198, %199 : vector<3x128xf32>
    %201 = arith.mulf %197, %197 : vector<3x128xf32>
    %202 = arith.addf %200, %201 : vector<3x128xf32>
    %203 = math.sqrt %202 : vector<3x128xf32>
    %c39 = arith.constant 39 : index
    %c0_19 = arith.constant 0 : index
    %204 = vector.load %arg2[%c39, %c0_19] : memref<45x128xf32, #tpu.memory_space<vmem>>, vector<3x128xf32>
    tpu.vector_store %arg2[%c39, %c0_19], %203 {strides = array<i32>} : memref<45x128xf32, #tpu.memory_space<vmem>>, vector<3x128xf32>,
    %205 = vector.extract_strided_slice %1 {offsets = [8, 0], sizes = [2, 128], strides = [1, 1]} : vector<10x128xf32> to vector<2x128xf32>
    %206 = vector.extract_strided_slice %1 {offsets = [0, 0], sizes = [2, 128], strides = [1, 1]} : vector<10x128xf32> to vector<2x128xf32>
    %207 = arith.subf %205, %206 : vector<2x128xf32>
    %208 = vector.extract_strided_slice %3 {offsets = [8, 0], sizes = [2, 128], strides = [1, 1]} : vector<10x128xf32> to vector<2x128xf32>
    %209 = vector.extract_strided_slice %3 {offsets = [0, 0], sizes = [2, 128], strides = [1, 1]} : vector<10x128xf32> to vector<2x128xf32>
    %210 = arith.subf %208, %209 : vector<2x128xf32>
    %211 = vector.extract_strided_slice %5 {offsets = [8, 0], sizes = [2, 128], strides = [1, 1]} : vector<10x128xf32> to vector<2x128xf32>
    %212 = vector.extract_strided_slice %5 {offsets = [0, 0], sizes = [2, 128], strides = [1, 1]} : vector<10x128xf32> to vector<2x128xf32>
    %213 = arith.subf %211, %212 : vector<2x128xf32>
    %214 = arith.mulf %207, %207 : vector<2x128xf32>
    %215 = arith.mulf %210, %210 : vector<2x128xf32>
    %216 = arith.addf %214, %215 : vector<2x128xf32>
    %217 = arith.mulf %213, %213 : vector<2x128xf32>
    %218 = arith.addf %216, %217 : vector<2x128xf32>
    %219 = math.sqrt %218 : vector<2x128xf32>
    %c42 = arith.constant 42 : index
    %c0_20 = arith.constant 0 : index
    %220 = vector.load %arg2[%c42, %c0_20] : memref<45x128xf32, #tpu.memory_space<vmem>>, vector<2x128xf32>
    tpu.vector_store %arg2[%c42, %c0_20], %219 {strides = array<i32>} : memref<45x128xf32, #tpu.memory_space<vmem>>, vector<2x128xf32>,
    %221 = vector.extract_strided_slice %1 {offsets = [9, 0], sizes = [1, 128], strides = [1, 1]} : vector<10x128xf32> to vector<1x128xf32>
    %222 = vector.extract_strided_slice %1 {offsets = [0, 0], sizes = [1, 128], strides = [1, 1]} : vector<10x128xf32> to vector<1x128xf32>
    %223 = arith.subf %221, %222 : vector<1x128xf32>
    %224 = vector.extract_strided_slice %3 {offsets = [9, 0], sizes = [1, 128], strides = [1, 1]} : vector<10x128xf32> to vector<1x128xf32>
    %225 = vector.extract_strided_slice %3 {offsets = [0, 0], sizes = [1, 128], strides = [1, 1]} : vector<10x128xf32> to vector<1x128xf32>
    %226 = arith.subf %224, %225 : vector<1x128xf32>
    %227 = vector.extract_strided_slice %5 {offsets = [9, 0], sizes = [1, 128], strides = [1, 1]} : vector<10x128xf32> to vector<1x128xf32>
    %228 = vector.extract_strided_slice %5 {offsets = [0, 0], sizes = [1, 128], strides = [1, 1]} : vector<10x128xf32> to vector<1x128xf32>
    %229 = arith.subf %227, %228 : vector<1x128xf32>
    %230 = arith.mulf %223, %223 : vector<1x128xf32>
    %231 = arith.mulf %226, %226 : vector<1x128xf32>
    %232 = arith.addf %230, %231 : vector<1x128xf32>
    %233 = arith.mulf %229, %229 : vector<1x128xf32>
    %234 = arith.addf %232, %233 : vector<1x128xf32>
    %235 = math.sqrt %234 : vector<1x128xf32>
    %c44 = arith.constant 44 : index
    %c0_21 = arith.constant 0 : index
    %236 = vector.load %arg2[%c44, %c0_21] : memref<45x128xf32, #tpu.memory_space<vmem>>, vector<1x128xf32>
    tpu.vector_store %arg2[%c44, %c0_21], %235 {strides = array<i32>} : memref<45x128xf32, #tpu.memory_space<vmem>>, vector<1x128xf32>,
    return
  }
  func.func @transform_0(%arg0: i32) -> (i32, i32, i32) {
    %c0_i32 = arith.constant 0 : i32
    %c0_i32_0 = arith.constant 0 : i32
    %c0_i32_1 = arith.constant 0 : i32
    return %c0_i32, %c0_i32_0, %arg0 : i32, i32, i32
  }
  func.func @transform_1(%arg0: i32) -> (i32, i32) {
    %c0_i32 = arith.constant 0 : i32
    %c0_i32_0 = arith.constant 0 : i32
    return %c0_i32, %arg0 : i32, i32
  }
  func.func @transform_2(%arg0: i32) -> (i32, i32) {
    %c0_i32 = arith.constant 0 : i32
    %c0_i32_0 = arith.constant 0 : i32
    return %c0_i32, %arg0 : i32, i32
  }
  func.func @transform_3(%arg0: i32) -> (i32, i32) {
    %c0_i32 = arith.constant 0 : i32
    %c0_i32_0 = arith.constant 0 : i32
    return %c0_i32, %arg0 : i32, i32
  }
  func.func @transform_4(%arg0: i32) -> (i32, i32) {
    %c0_i32 = arith.constant 0 : i32
    %c0_i32_0 = arith.constant 0 : i32
    return %c0_i32, %arg0 : i32, i32
  }
}

</mosaic_0001>

<llo_original>
// kernel: feature_old.1
$region0: #{feature_old.1}
  #allocation0 [shape = 'u32[]', space=smem, size = 0x4, offset = 0x4, fixed_abs, tag = 'smem constant byte address 0x4 - core index']
  #allocation1 [shape = 'u32[144,128]{1,0:T(1,128)}', space=vmem, size = 0x12000, scoped, tag = 'internal scratch']
  %s0 = inlined_call_operand.vmem [shape: f32[3,10,128], index: 0, kind: input, shape index: {}]
  %s1 = inlined_call_operand.vmem [shape: f32[45,128], index: 1, kind: output, shape index: {0}]
  %s2 = inlined_call_operand.vmem [shape: f32[8,128], index: 2, kind: output, shape index: {1}]
  %s3 = inlined_call_operand.vmem [shape: f32[7,128], index: 3, kind: output, shape index: {2}]
  %s4 = inlined_call_operand.vmem [shape: f32[7,128], index: 4, kind: output, shape index: {3}]
  %5 = xla_tuple %s1, %s2, %s3, %s4
  %s6 = sld [smem:[#allocation0]]
  $region38: #{feature_old.1} parent=0
    _
  %s8 = ssub.s32 1, %s6
  %s9 = scalar_select 0, %s8, %s6
  // Predicated region
  $region2: #{feature_old.1} parent=0 // pred_check
    _
  $region3: #{feature_old.1} parent=0 // pred_check_branch
    %11 = sbr.rel (0) target = $region5
  $region4: #{feature_old.1} parent=0 // pred_region
    _
  $region5: #{feature_old.1} parent=0 // pred_fallthru
    _
  %v12 = vld [vmem:[%s0] sm:$0xff]
  %v13 = vld [vmem:[%s0 + $0x8] sm:$0x3]
  %s14 = scalar_lea.vmem %s0, 16
  %v15 = vld [vmem:[%s14] sm:$0xff]
  %v16 = vld [vmem:[%s14 + $0x8] sm:$0x3]
  %s17 = scalar_lea.vmem %s0, 32
  %v18 = vld [vmem:[%s17] sm:$0xff]
  %v19 = vld [vmem:[%s17 + $0x8] sm:$0x3]
  %vm22 = vcmask 1040384
  %v23 = vrot.slane %v12, 7
  %v24 = vrot.slane %v13, 7
  %v25 = vsel %vm22, %v23, %v24
  %v28 = vsub.f32 %v12, %v23
  %v29 = vsub.f32 %v13, %v25
  %v32 = vrot.slane %v15, 7
  %v33 = vrot.slane %v16, 7
  %v34 = vsel %vm22, %v32, %v33
  %v37 = vsub.f32 %v15, %v32
  %v38 = vsub.f32 %v16, %v34
  %v41 = vrot.slane %v18, 7
  %v42 = vrot.slane %v19, 7
  %v43 = vsel %vm22, %v41, %v42
  %v46 = vsub.f32 %v18, %v41
  %v47 = vsub.f32 %v19, %v43
  %vm50 = vcmask 1046528
  %v51 = vrot.slane %v46, 1
  %v52 = vrot.slane %v47, 1
  %v53 = vsel %vm50, %v51, %v52
  %v56 = vmul.f32 %v37, %v53
  %v57 = vmul.f32 %v38, %v52
  %v60 = vrot.slane %v37, 1
  %v61 = vrot.slane %v38, 1
  %v62 = vsel %vm50, %v60, %v61
  %v65 = vmul.f32 %v46, %v62
  %v66 = vmul.f32 %v47, %v61
  %v67 = vsub.f32 %v56, %v65
  %v68 = vsub.f32 %v57, %v66
  %v71 = vrot.slane %v28, 1
  %v72 = vrot.slane %v29, 1
  %v73 = vsel %vm50, %v71, %v72
  %v76 = vmul.f32 %v46, %v73
  %v77 = vmul.f32 %v47, %v72
  %v78 = vmul.f32 %v28, %v53
  %v79 = vmul.f32 %v29, %v52
  %v80 = vsub.f32 %v76, %v78
  %v81 = vsub.f32 %v77, %v79
  %v82 = vmul.f32 %v28, %v62
  %v83 = vmul.f32 %v29, %v61
  %v84 = vmul.f32 %v37, %v73
  %v85 = vmul.f32 %v38, %v72
  %v86 = vsub.f32 %v82, %v84
  %v87 = vsub.f32 %v83, %v85
  %v88 = vmul.f32 %v80, %v46
  %v89 = vmul.f32 %v81, %v47
  %v90 = vmul.f32 %v86, %v37
  %v91 = vmul.f32 %v87, %v38
  %v92 = vsub.f32 %v88, %v90
  %v93 = vsub.f32 %v89, %v91
  %v94 = vmul.f32 %v86, %v28
  %v95 = vmul.f32 %v87, %v29
  %v96 = vmul.f32 %v67, %v46
  %v97 = vmul.f32 %v68, %v47
  %v98 = vsub.f32 %v94, %v96
  %v99 = vsub.f32 %v95, %v97
  %v100 = vmul.f32 %v67, %v37
  %v101 = vmul.f32 %v68, %v38
  %v102 = vmul.f32 %v80, %v28
  %v103 = vmul.f32 %v81, %v29
  %v104 = vsub.f32 %v100, %v102
  %v105 = vsub.f32 %v101, %v103
  %v106 = vmul.f32 %v67, %v67
  %v107 = vmul.f32 %v80, %v80
  %v108 = vadd.f32 %v106, %v107
  %v109 = vmul.f32 %v86, %v86
  %v110 = vadd.f32 %v108, %v109
  %v111 = vrsqrt.pop %v110
  %v112 = vmul.f32 %v68, %v68
  %v113 = vmul.f32 %v81, %v81
  %v114 = vadd.f32 %v112, %v113
  %v115 = vmul.f32 %v87, %v87
  %v116 = vadd.f32 %v114, %v115
  %v117 = vrsqrt.pop %v116
  %v118 = vmul.f32 %v92, %v92
  %v119 = vmul.f32 %v93, %v93
  %v120 = vmul.f32 %v98, %v98
  %v121 = vmul.f32 %v99, %v99
  %v122 = vadd.f32 %v118, %v120
  %v123 = vadd.f32 %v119, %v121
  %v124 = vmul.f32 %v104, %v104
  %v125 = vmul.f32 %v105, %v105
  %v126 = vadd.f32 %v122, %v124
  %v127 = vadd.f32 %v123, %v125
  %v128 = vrsqrt.pop %v126
  %v129 = vrsqrt.pop %v127
  %v132 = vrot.slane %v67, 1
  %v133 = vrot.slane %v68, 1
  %v134 = vsel %vm50, %v132, %v133
  %v136 = vmul.f32 %v67, %v134
  %v139 = vrot.slane %v80, 1
  %v140 = vrot.slane %v81, 1
  %v141 = vsel %vm50, %v139, %v140
  %v143 = vmul.f32 %v80, %v141
  %v144 = vadd.f32 %v136, %v143
  %v147 = vrot.slane %v86, 1
  %v148 = vrot.slane %v87, 1
  %v149 = vsel %vm50, %v147, %v148
  %v151 = vmul.f32 %v86, %v149
  %v152 = vadd.f32 %v144, %v151
  %v153 = vmul.f32 %v152, %v111
  %v156 = vrot.slane %v111, 1
  %v157 = vrot.slane %v117, 1
  %v158 = vsel %vm50, %v156, %v157
  %v160 = vmul.f32 %v153, %v158
  %161 = vst [vmem:[%s3 - $0x1] sm:$0xfe] %v160
  %v164 = vrot.slane %v92, 1
  %v165 = vrot.slane %v93, 1
  %v166 = vsel %vm50, %v164, %v165
  %v168 = vmul.f32 %v67, %v166
  %v171 = vrot.slane %v98, 1
  %v172 = vrot.slane %v99, 1
  %v173 = vsel %vm50, %v171, %v172
  %v175 = vmul.f32 %v80, %v173
  %v176 = vadd.f32 %v168, %v175
  %v179 = vrot.slane %v104, 1
  %v180 = vrot.slane %v105, 1
  %v181 = vsel %vm50, %v179, %v180
  %v183 = vmul.f32 %v86, %v181
  %v184 = vadd.f32 %v176, %v183
  %v185 = vmul.f32 %v184, %v111
  %v188 = vrot.slane %v128, 1
  %v189 = vrot.slane %v129, 1
  %v190 = vsel %vm50, %v188, %v189
  %v192 = vmul.f32 %v185, %v190
  %193 = vst [vmem:[%s4 - $0x1] sm:$0xfe] %v192
  %v194 = vmul.f32 %v28, %v28
  %v195 = vmul.f32 %v29, %v29
  %v196 = vmul.f32 %v37, %v37
  %v197 = vmul.f32 %v38, %v38
  %v198 = vadd.f32 %v194, %v196
  %v199 = vadd.f32 %v195, %v197
  %v200 = vmul.f32 %v46, %v46
  %v201 = vmul.f32 %v47, %v47
  %v202 = vadd.f32 %v198, %v200
  %v203 = vadd.f32 %v199, %v201
  %v204 = vrsqrt.pop %v202
  %v205 = vrsqrt.pop %v203
  %v206 = vmul.f32 %v28, %v73
  %v207 = vmul.f32 %v29, %v72
  %v208 = vmul.f32 %v37, %v62
  %v209 = vmul.f32 %v38, %v61
  %v210 = vadd.f32 %v206, %v208
  %v211 = vadd.f32 %v207, %v209
  %v212 = vmul.f32 %v46, %v53
  %v213 = vmul.f32 %v47, %v52
  %v214 = vadd.f32 %v210, %v212
  %v215 = vadd.f32 %v211, %v213
  %v216 = vmul.f32 %v214, %v204
  %v217 = vmul.f32 %v215, %v205
  %v220 = vrot.slane %v204, 1
  %v221 = vrot.slane %v205, 1
  %v222 = vsel %vm50, %v220, %v221
  %v225 = vmul.f32 %v216, %v222
  %v226 = vmul.f32 %v217, %v221
  %227 = vst [vmem:[%s2 - $0x1] sm:$0xfe] %v225
  %228 = vst [vmem:[%s2 + $0x7] sm:$0x1] %v226
  %v229 = vrsqrt.pop %v202
  %v230 = vmul.f32 %v202, %v229
  %vm231 = vcmp.eq.f32.partialorder %v202, inf
  %v232 = vsel %vm231, %v202, %v230
  %vm233 = vcmp.eq.f32.partialorder %v202, 0.0
  %v234 = vand.u32 %v202, 2147483648
  %v235 = vsel %vm233, %v234, %v232
  %v236 = vrsqrt.pop %v203
  %v237 = vmul.f32 %v203, %v236
  %vm238 = vcmp.eq.f32.partialorder %v203, inf
  %v239 = vsel %vm238, %v203, %v237
  %vm240 = vcmp.eq.f32.partialorder %v203, 0.0
  %v241 = vand.u32 %v203, 2147483648
  %v242 = vsel %vm240, %v241, %v239
  %243 = vst [vmem:[%s1 - $0x1] sm:$0xfe] %v235
  %244 = vst [vmem:[%s1 + $0x7] sm:$0x3] %v242
  %v245 = vrot.slane %v12, 6
  %v247 = vsub.f32 %v12, %v245
  %v248 = vsub.f32 %v13, %v245
  %v249 = vrot.slane %v15, 6
  %v251 = vsub.f32 %v15, %v249
  %v252 = vsub.f32 %v16, %v249
  %v253 = vrot.slane %v18, 6
  %v255 = vsub.f32 %v18, %v253
  %v256 = vsub.f32 %v19, %v253
  %v257 = vmul.f32 %v247, %v247
  %v258 = vmul.f32 %v248, %v248
  %v259 = vmul.f32 %v251, %v251
  %v260 = vmul.f32 %v252, %v252
  %v261 = vadd.f32 %v257, %v259
  %v262 = vadd.f32 %v258, %v260
  %v263 = vmul.f32 %v255, %v255
  %v264 = vmul.f32 %v256, %v256
  %v265 = vadd.f32 %v261, %v263
  %v266 = vadd.f32 %v262, %v264
  %v267 = vrsqrt.pop %v265
  %v268 = vmul.f32 %v265, %v267
  %vm269 = vcmp.eq.f32.partialorder %v265, inf
  %v270 = vsel %vm269, %v265, %v268
  %vm271 = vcmp.eq.f32.partialorder %v265, 0.0
  %v272 = vand.u32 %v265, 2147483648
  %v273 = vsel %vm271, %v272, %v270
  %v274 = vrsqrt.pop %v266
  %v275 = vmul.f32 %v266, %v274
  %vm276 = vcmp.eq.f32.partialorder %v266, inf
  %v277 = vsel %vm276, %v266, %v275
  %vm278 = vcmp.eq.f32.partialorder %v266, 0.0
  %v279 = vand.u32 %v266, 2147483648
  %v280 = vsel %vm278, %v279, %v277
  %281 = vst [vmem:[%s1 + $0x7] sm:$0xfc] %v273
  %282 = vst [vmem:[%s1 + $0xf] sm:$0x3] %v280
  %v283 = vrot.slane %v12, 5
  %v285 = vsub.f32 %v12, %v283
  %v286 = vsub.f32 %v13, %v283
  %v287 = vrot.slane %v15, 5
  %v289 = vsub.f32 %v15, %v287
  %v290 = vsub.f32 %v16, %v287
  %v291 = vrot.slane %v18, 5
  %v293 = vsub.f32 %v18, %v291
  %v294 = vsub.f32 %v19, %v291
  %v295 = vmul.f32 %v285, %v285
  %v296 = vmul.f32 %v286, %v286
  %v297 = vmul.f32 %v289, %v289
  %v298 = vmul.f32 %v290, %v290
  %v299 = vadd.f32 %v295, %v297
  %v300 = vadd.f32 %v296, %v298
  %v301 = vmul.f32 %v293, %v293
  %v302 = vmul.f32 %v294, %v294
  %v303 = vadd.f32 %v299, %v301
  %v304 = vadd.f32 %v300, %v302
  %v305 = vrsqrt.pop %v303
  %v306 = vmul.f32 %v303, %v305
  %vm307 = vcmp.eq.f32.partialorder %v303, inf
  %v308 = vsel %vm307, %v303, %v306
  %vm309 = vcmp.eq.f32.partialorder %v303, 0.0
  %v310 = vand.u32 %v303, 2147483648
  %v311 = vsel %vm309, %v310, %v308
  %v312 = vrsqrt.pop %v304
  %v313 = vmul.f32 %v304, %v312
  %vm314 = vcmp.eq.f32.partialorder %v304, inf
  %v315 = vsel %vm314, %v304, %v313
  %vm316 = vcmp.eq.f32.partialorder %v304, 0.0
  %v317 = vand.u32 %v304, 2147483648
  %v318 = vsel %vm316, %v317, %v315
  %319 = vst [vmem:[%s1 + $0xe] sm:$0xf8] %v311
  %320 = vst [vmem:[%s1 + $0x16] sm:$0x3] %v318
  %v321 = vrot.slane %v12, 4
  %v323 = vsub.f32 %v12, %v321
  %v324 = vsub.f32 %v13, %v321
  %v325 = vrot.slane %v15, 4
  %v327 = vsub.f32 %v15, %v325
  %v328 = vsub.f32 %v16, %v325
  %v329 = vrot.slane %v18, 4
  %v331 = vsub.f32 %v18, %v329
  %v332 = vsub.f32 %v19, %v329
  %v333 = vmul.f32 %v323, %v323
  %v334 = vmul.f32 %v324, %v324
  %v335 = vmul.f32 %v327, %v327
  %v336 = vmul.f32 %v328, %v328
  %v337 = vadd.f32 %v333, %v335
  %v338 = vadd.f32 %v334, %v336
  %v339 = vmul.f32 %v331, %v331
  %v340 = vmul.f32 %v332, %v332
  %v341 = vadd.f32 %v337, %v339
  %v342 = vadd.f32 %v338, %v340
  %v343 = vrsqrt.pop %v341
  %v344 = vmul.f32 %v341, %v343
  %vm345 = vcmp.eq.f32.partialorder %v341, inf
  %v346 = vsel %vm345, %v341, %v344
  %vm347 = vcmp.eq.f32.partialorder %v341, 0.0
  %v348 = vand.u32 %v341, 2147483648
  %v349 = vsel %vm347, %v348, %v346
  %v350 = vrsqrt.pop %v342
  %v351 = vmul.f32 %v342, %v350
  %vm352 = vcmp.eq.f32.partialorder %v342, inf
  %v353 = vsel %vm352, %v342, %v351
  %vm354 = vcmp.eq.f32.partialorder %v342, 0.0
  %v355 = vand.u32 %v342, 2147483648
  %v356 = vsel %vm354, %v355, %v353
  %357 = vst [vmem:[%s1 + $0x14] sm:$0xf0] %v349
  %358 = vst [vmem:[%s1 + $0x1c] sm:$0x3] %v356
  %v359 = vrot.slane %v12, 3
  %v361 = vsub.f32 %v12, %v359
  %v362 = vsub.f32 %v13, %v359
  %v363 = vrot.slane %v15, 3
  %v365 = vsub.f32 %v15, %v363
  %v366 = vsub.f32 %v16, %v363
  %v367 = vrot.slane %v18, 3
  %v369 = vsub.f32 %v18, %v367
  %v370 = vsub.f32 %v19, %v367
  %v371 = vmul.f32 %v361, %v361
  %v372 = vmul.f32 %v362, %v362
  %v373 = vmul.f32 %v365, %v365
  %v374 = vmul.f32 %v366, %v366
  %v375 = vadd.f32 %v371, %v373
  %v376 = vadd.f32 %v372, %v374
  %v377 = vmul.f32 %v369, %v369
  %v378 = vmul.f32 %v370, %v370
  %v379 = vadd.f32 %v375, %v377
  %v380 = vadd.f32 %v376, %v378
  %v381 = vrsqrt.pop %v379
  %v382 = vmul.f32 %v379, %v381
  %vm383 = vcmp.eq.f32.partialorder %v379, inf
  %v384 = vsel %vm383, %v379, %v382
  %vm385 = vcmp.eq.f32.partialorder %v379, 0.0
  %v386 = vand.u32 %v379, 2147483648
  %v387 = vsel %vm385, %v386, %v384
  %v388 = vrsqrt.pop %v380
  %v389 = vmul.f32 %v380, %v388
  %vm390 = vcmp.eq.f32.partialorder %v380, inf
  %v391 = vsel %vm390, %v380, %v389
  %vm392 = vcmp.eq.f32.partialorder %v380, 0.0
  %v393 = vand.u32 %v380, 2147483648
  %v394 = vsel %vm392, %v393, %v391
  %395 = vst [vmem:[%s1 + $0x19] sm:$0xe0] %v387
  %396 = vst [vmem:[%s1 + $0x21] sm:$0x3] %v394
  %v397 = vrot.slane %v12, 2
  %v399 = vsub.f32 %v12, %v397
  %v400 = vsub.f32 %v13, %v397
  %v401 = vrot.slane %v15, 2
  %v403 = vsub.f32 %v15, %v401
  %v404 = vsub.f32 %v16, %v401
  %v405 = vrot.slane %v18, 2
  %v407 = vsub.f32 %v18, %v405
  %v408 = vsub.f32 %v19, %v405
  %v409 = vmul.f32 %v399, %v399
  %v410 = vmul.f32 %v400, %v400
  %v411 = vmul.f32 %v403, %v403
  %v412 = vmul.f32 %v404, %v404
  %v413 = vadd.f32 %v409, %v411
  %v414 = vadd.f32 %v410, %v412
  %v415 = vmul.f32 %v407, %v407
  %v416 = vmul.f32 %v408, %v408
  %v417 = vadd.f32 %v413, %v415
  %v418 = vadd.f32 %v414, %v416
  %v419 = vrsqrt.pop %v417
  %v420 = vmul.f32 %v417, %v419
  %vm421 = vcmp.eq.f32.partialorder %v417, inf
  %v422 = vsel %vm421, %v417, %v420
  %vm423 = vcmp.eq.f32.partialorder %v417, 0.0
  %v424 = vand.u32 %v417, 2147483648
  %v425 = vsel %vm423, %v424, %v422
  %v426 = vrsqrt.pop %v418
  %v427 = vmul.f32 %v418, %v426
  %vm428 = vcmp.eq.f32.partialorder %v418, inf
  %v429 = vsel %vm428, %v418, %v427
  %vm430 = vcmp.eq.f32.partialorder %v418, 0.0
  %v431 = vand.u32 %v418, 2147483648
  %v432 = vsel %vm430, %v431, %v429
  %433 = vst [vmem:[%s1 + $0x1d] sm:$0xc0] %v425
  %434 = vst [vmem:[%s1 + $0x25] sm:$0x3] %v432
  %v435 = vrot.slane %v12, 1
  %v437 = vsub.f32 %v12, %v435
  %v438 = vsub.f32 %v13, %v435
  %v439 = vrot.slane %v15, 1
  %v441 = vsub.f32 %v15, %v439
  %v442 = vsub.f32 %v16, %v439
  %v443 = vrot.slane %v18, 1
  %v445 = vsub.f32 %v18, %v443
  %v446 = vsub.f32 %v19, %v443
  %v447 = vmul.f32 %v437, %v437
  %v448 = vmul.f32 %v438, %v438
  %v449 = vmul.f32 %v441, %v441
  %v450 = vmul.f32 %v442, %v442
  %v451 = vadd.f32 %v447, %v449
  %v452 = vadd.f32 %v448, %v450
  %v453 = vmul.f32 %v445, %v445
  %v454 = vmul.f32 %v446, %v446
  %v455 = vadd.f32 %v451, %v453
  %v456 = vadd.f32 %v452, %v454
  %v457 = vrsqrt.pop %v455
  %v458 = vmul.f32 %v455, %v457
  %vm459 = vcmp.eq.f32.partialorder %v455, inf
  %v460 = vsel %vm459, %v455, %v458
  %vm461 = vcmp.eq.f32.partialorder %v455, 0.0
  %v462 = vand.u32 %v455, 2147483648
  %v463 = vsel %vm461, %v462, %v460
  %v464 = vrsqrt.pop %v456
  %v465 = vmul.f32 %v456, %v464
  %vm466 = vcmp.eq.f32.partialorder %v456, inf
  %v467 = vsel %vm466, %v456, %v465
  %vm468 = vcmp.eq.f32.partialorder %v456, 0.0
  %v469 = vand.u32 %v456, 2147483648
  %v470 = vsel %vm468, %v469, %v467
  %471 = vst [vmem:[%s1 + $0x20] sm:$0x80] %v463
  %472 = vst [vmem:[%s1 + $0x28] sm:$0x3] %v470
  %v473 = vsub.f32 %v13, %v12
  %v474 = vsub.f32 %v16, %v15
  %v475 = vsub.f32 %v19, %v18
  %v476 = vmul.f32 %v473, %v473
  %v477 = vmul.f32 %v474, %v474
  %v478 = vadd.f32 %v476, %v477
  %v479 = vmul.f32 %v475, %v475
  %v480 = vadd.f32 %v478, %v479
  %v481 = vrsqrt.pop %v480
  %v482 = vmul.f32 %v480, %v481
  %vm483 = vcmp.eq.f32.partialorder %v480, inf
  %v484 = vsel %vm483, %v480, %v482
  %vm485 = vcmp.eq.f32.partialorder %v480, 0.0
  %v486 = vand.u32 %v480, 2147483648
  %v487 = vsel %vm485, %v486, %v484
  %488 = vst [vmem:[%s1 + $0x2a] sm:$0x3] %v487
  %v489 = vsub.f32 %v13, %v23
  %v490 = vsub.f32 %v16, %v32
  %v491 = vsub.f32 %v19, %v41
  %v492 = vmul.f32 %v489, %v489
  %v493 = vmul.f32 %v490, %v490
  %v494 = vadd.f32 %v492, %v493
  %v495 = vmul.f32 %v491, %v491
  %v496 = vadd.f32 %v494, %v495
  %v497 = vrsqrt.pop %v496
  %v498 = vmul.f32 %v496, %v497
  %vm499 = vcmp.eq.f32.partialorder %v496, inf
  %v500 = vsel %vm499, %v496, %v498
  %vm501 = vcmp.eq.f32.partialorder %v496, 0.0
  %v502 = vand.u32 %v496, 2147483648
  %v503 = vsel %vm501, %v502, %v500
  %504 = vst [vmem:[%s1 + $0x2b] sm:$0x2] %v503
  // Predicated region
  $region6: #{feature_old.1} parent=0 // pred_check
    _
  $region7: #{feature_old.1} parent=0 // pred_check_branch
    %506 = sbr.rel (0) target = $region9
  $region8: #{feature_old.1} parent=0 // pred_region
    _
  $region9: #{feature_old.1} parent=0 // pred_fallthru
    _
  // Predicated region
  $region10: #{feature_old.1} parent=0 // pred_check
    _
  $region11: #{feature_old.1} parent=0 // pred_check_branch
    %508 = sbr.rel (0) target = $region13
  $region12: #{feature_old.1} parent=0 // pred_region
    _
  $region13: #{feature_old.1} parent=0 // pred_fallthru
    _
  // Predicated region
  $region14: #{feature_old.1} parent=0 // pred_check
    _
  $region15: #{feature_old.1} parent=0 // pred_check_branch
    %510 = sbr.rel (0) target = $region17
  $region16: #{feature_old.1} parent=0 // pred_region
    _
  $region17: #{feature_old.1} parent=0 // pred_fallthru
    _
  // Predicated region
  $region18: #{feature_old.1} parent=0 // pred_check
    _
  $region19: #{feature_old.1} parent=0 // pred_check_branch
    %512 = sbr.rel (0) target = $region21
  $region20: #{feature_old.1} parent=0 // pred_region
    _
  $region21: #{feature_old.1} parent=0 // pred_fallthru
    _
  // Predicated region
  $region22: #{feature_old.1} parent=0 // pred_check
    _
  $region23: #{feature_old.1} parent=0 // pred_check_branch
    %514 = sbr.rel (0) target = $region25
  $region24: #{feature_old.1} parent=0 // pred_region
    _
  $region25: #{feature_old.1} parent=0 // pred_fallthru
    _
  // Predicated region
  $region26: #{feature_old.1} parent=0 // pred_check
    _
  $region27: #{feature_old.1} parent=0 // pred_check_branch
    %516 = sbr.rel (0) target = $region29
  $region28: #{feature_old.1} parent=0 // pred_region
    _
  $region29: #{feature_old.1} parent=0 // pred_fallthru
    _
  // Predicated region
  $region30: #{feature_old.1} parent=0 // pred_check
    _
  $region31: #{feature_old.1} parent=0 // pred_check_branch
    %518 = sbr.rel (0) target = $region33
  $region32: #{feature_old.1} parent=0 // pred_region
    _
  $region33: #{feature_old.1} parent=0 // pred_fallthru
    _
  // Predicated region
  $region34: #{feature_old.1} parent=0 // pred_check
    _
  $region35: #{feature_old.1} parent=0 // pred_check_branch
    %520 = sbr.rel (0) target = $region37
  $region36: #{feature_old.1} parent=0 // pred_region
    _
  $region37: #{feature_old.1} parent=0 // pred_fallthru
    _

</llo_original>
